<compile_context>
chip_gen: v6e
topology: v6e:2x2x1
jax: 0.10.0
libtpu: 0.0.40
codegen_flags: <defaults>
</compile_context>

<pallas_src>
import jax
import jax.numpy as jnp
from jax import lax
from jax.experimental import pallas as pl
from jax.experimental.pallas import tpu as pltpu


def _sigmoid(x):
    # exp and the approximate reciprocal both use the (otherwise idle) EUP slot.
    return pl.reciprocal(1.0 + jnp.exp(-x), approx=True)


def _decoder_kernel_fused(a_ref, b_ref, o_ref):
    """One (tm, tn) output tile of sigmoid(h @ h.T), full-D contraction.

    a_ref: (tm, D) rows i of h (compute dtype, e.g. bf16)
    b_ref: (tn, D) rows j of h, contracted on the last dim (no in-kernel transpose)
    o_ref: (tm, tn) output tile
    """
    prod = lax.dot_general(
        a_ref[...],
        b_ref[...],
        dimension_numbers=(((1,), (1,)), ((), ())),  # a @ b.T
        preferred_element_type=jnp.float32,
    )
    o_ref[...] = _sigmoid(prod).astype(o_ref.dtype)


def _decoder_kernel_kred(a_ref, b_ref, o_ref, acc_ref):
    """Fallback for very large D: k-innermost reduction with an f32 accumulator."""
    k = pl.program_id(2)

    @pl.when(k == 0)
    def _():
        acc_ref[...] = jnp.zeros_like(acc_ref)

    acc_ref[...] += lax.dot_general(
        a_ref[...],
        b_ref[...],
        dimension_numbers=(((1,), (1,)), ((), ())),
        preferred_element_type=jnp.float32,
    )

    @pl.when(k == pl.num_programs(2) - 1)
    def _():
        o_ref[...] = _sigmoid(acc_ref[...]).astype(o_ref.dtype)


def _vmem_capacity_bytes():
    try:
        cap = getattr(pltpu.get_tpu_info(), "vmem_capacity_bytes", None)
        if cap:
            return int(cap)
    except Exception:
        pass
    return 64 << 20  # conservative fallback (v7x has the smallest VMEM)


def dot_product_decoder(h, *, tile=512, compute_dtype=jnp.bfloat16, out_dtype=None):
    """sigmoid(h @ h.T) via a tiled Pallas matmul with a fused sigmoid epilogue.

    compute_dtype: MXU operand dtype (bf16 default: native MXU rate, half the reads).
                   Accumulation is always f32.
    out_dtype:     defaults to h.dtype (module semantics); pass jnp.bfloat16 to
                   halve the dominant N^2 store traffic in the small-D regime.
    """
    N, D = h.shape
    if out_dtype is None:
        out_dtype = h.dtype

    in_bytes = jnp.dtype(compute_dtype).itemsize
    out_bytes = jnp.dtype(out_dtype).itemsize

    # ---- tile selection ----------------------------------------------------
    n128 = pl.cdiv(N, 128) * 128
    tm = min(int(tile), n128)
    if n128 >= 512:
        # Keep >= 2 output tiles per parallel axis so v7x megacore shards the
        # grid across both TensorCores; keep tiles multiples of 256 (2x256 MXU).
        half = max((n128 // 2) // 256 * 256, 256)
        tm = min(tm, half)
    if tm >= 256:
        tm = (tm // 256) * 256
    tn = tm

    grid_m = pl.cdiv(N, tm)
    grid_n = pl.cdiv(N, tn)

    # Zero-pad only the (N, D) input so edge blocks read defined data; the
    # (N, N) output is written at its true shape (Pallas masks edge stores),
    # avoiding the padded-output write + slice round trip over N^2 elements.
    Np = grid_m * tm
    hp = h.astype(compute_dtype)
    if Np != N:
        hp = jnp.pad(hp, ((0, Np - N), (0, 0)))

    # ---- VMEM accounting (generation-aware) ---------------------------------
    vmem_cap = _vmem_capacity_bytes()
    vmem_budget = int(vmem_cap * 0.7)            # headroom for compiler scratch
    out_buf_bytes = 2 * tm * tn * out_bytes      # double-buffered output tile
    # Largest D whose full-width (tm, D) blocks (2 inputs x 2 buffers) still fit.
    max_fused_d = max((vmem_budget - out_buf_bytes) // (4 * tm * in_bytes), 256)
    max_fused_d = (max_fused_d // 128) * 128

    if D <= max_fused_d:
        d_lanes = pl.cdiv(D, 128) * 128
        need = 4 * tm * d_lanes * in_bytes + out_buf_bytes
        vmem_limit = int(min(vmem_cap, max(need + (4 << 20), 16 << 20)))
        out = pl.pallas_call(
            _decoder_kernel_fused,
            out_shape=jax.ShapeDtypeStruct((N, N), out_dtype),
            grid=(grid_m, grid_n),
            in_specs=[
                pl.BlockSpec((tm, D), lambda i, j: (i, 0)),  # rows i of h
                pl.BlockSpec((tn, D), lambda i, j: (j, 0)),  # rows j of h
            ],
            out_specs=pl.BlockSpec((tm, tn), lambda i, j: (i, j)),
            compiler_params=pltpu.CompilerParams(
                dimension_semantics=("parallel", "parallel"),
                vmem_limit_bytes=vmem_limit,
            ),
        )(hp, hp)
    else:
        # Very large latent dim: tile the reduction.  bf16 inputs keep the
        # (tile, tk) blocks small, so tk=1024 -> few pipeline steps.
        tk = 1024
        Dp = pl.cdiv(D, tk) * tk
        if Dp != D:
            hp = jnp.pad(hp, ((0, 0), (0, Dp - D)))
        need = 4 * tm * tk * in_bytes + out_buf_bytes + tm * tn * 4
        vmem_limit = int(min(vmem_cap, max(need + (4 << 20), 16 << 20)))
        out = pl.pallas_call(
            _decoder_kernel_kred,
            out_shape=jax.ShapeDtypeStruct((N, N), out_dtype),
            grid=(grid_m, grid_n, Dp // tk),
            in_specs=[
                pl.BlockSpec((tm, tk), lambda i, j, k: (i, k)),
                pl.BlockSpec((tn, tk), lambda i, j, k: (j, k)),
            ],
            out_specs=pl.BlockSpec((tm, tn), lambda i, j, k: (i, j)),
            scratch_shapes=[pltpu.VMEM((tm, tn), jnp.float32)],
            compiler_params=pltpu.CompilerParams(
                dimension_semantics=("parallel", "parallel", "arbitrary"),
                vmem_limit_bytes=vmem_limit,
            ),
        )(hp, hp)

    return out


if __name__ == "__main__":
    # DotProductDecoder has no learnable parameters; only the input h matters.
    key = jax.random.PRNGKey(0)
    N, D = 256, 64
    h = jax.random.normal(key, (N, D), dtype=jnp.float32)
    ref = jax.nn.sigmoid(h @ h.T)

    # Default path: bf16 MXU operands, f32 accumulation, f32 output.
    edge_scores = jax.block_until_ready(dot_product_decoder(h))
    assert edge_scores.shape == (N, N)
    assert jnp.allclose(edge_scores, ref, atol=3e-2, rtol=3e-2), "bf16 path mismatch"

    # f32-operand path with a non-divisible N to exercise masked edge stores.
    N2, D2 = 456, 48
    h2 = jax.random.normal(jax.random.PRNGKey(0), (N2, D2), dtype=jnp.float32)
    ref2 = jax.nn.sigmoid(h2 @ h2.T)
    out_f32 = jax.block_until_ready(
        dot_product_decoder(h2, compute_dtype=jnp.float32)
    )
    assert out_f32.shape == (N2, N2)
    assert jnp.allclose(out_f32, ref2, atol=2e-3, rtol=2e-3), "f32 path mismatch"

    print("KERNEL_OK")
</pallas_src>

<mosaic_0001>
module attributes {stable_mosaic.version = 11 : i64} {
  func.func @_decoder_kernel_fused(%arg0: i32, %arg1: i32, %arg2: memref<256x64xbf16, #tpu.memory_space<vmem>>, %arg3: memref<256x64xbf16, #tpu.memory_space<vmem>>, %arg4: memref<256x256xf32, #tpu.memory_space<vmem>>) attributes {dimension_semantics = [#tpu.dimension_semantics<parallel>, #tpu.dimension_semantics<parallel>], iteration_bounds = array<i64: 1, 1>, scalar_prefetch = 0 : i64, scratch_operands = 0 : i64, tpu.core_type = #tpu.core_type<tc>, window_params = [{transform_indices = @transform_0, window_bounds = array<i64: 256, 64>}, {transform_indices = @transform_1, window_bounds = array<i64: 256, 64>}, {transform_indices = @transform_2, window_bounds = array<i64: 256, 256>}]} {
    %c0 = arith.constant 0 : index
    %c0_0 = arith.constant 0 : index
    %0 = vector.load %arg2[%c0, %c0_0] : memref<256x64xbf16, #tpu.memory_space<vmem>>, vector<256x64xbf16>
    %c0_1 = arith.constant 0 : index
    %c0_2 = arith.constant 0 : index
    %1 = vector.load %arg3[%c0_1, %c0_2] : memref<256x64xbf16, #tpu.memory_space<vmem>>, vector<256x64xbf16>
    %cst = arith.constant dense<0.000000e+00> : vector<256x256xf32>
    %2 = tpu.matmul %0, %1, %cst {dimension_numbers = #tpu.dot_dimension_numbers<[1], [1], [0], [0], [0, 0, 1, 0], [], []>} : vector<256x64xbf16>, vector<256x64xbf16>, vector<256x256xf32> -> vector<256x256xf32>
    %cst_3 = arith.constant 0.000000e+00 : f32
    %3 = vector.broadcast %cst_3 : f32 to vector<256x256xf32>
    %4 = arith.subf %3, %2 : vector<256x256xf32>
    %5 = math.exp %4 : vector<256x256xf32>
    %cst_4 = arith.constant 1.000000e+00 : f32
    %6 = vector.broadcast %cst_4 : f32 to vector<256x256xf32>
    %7 = arith.addf %6, %5 : vector<256x256xf32>
    %8 = tpu.reciprocal %7 {approx = true} : vector<256x256xf32> -> vector<256x256xf32>
    %c0_5 = arith.constant 0 : index
    %c0_6 = arith.constant 0 : index
    %9 = vector.load %arg4[%c0_5, %c0_6] : memref<256x256xf32, #tpu.memory_space<vmem>>, vector<256x256xf32>
    tpu.vector_store %arg4[%c0_5, %c0_6], %8 {strides = array<i32>} : memref<256x256xf32, #tpu.memory_space<vmem>>, vector<256x256xf32>,
    return
  }
  func.func @transform_0(%arg0: i32, %arg1: i32) -> (i32, i32) {
    %c0_i32 = arith.constant 0 : i32
    %c0_i32_0 = arith.constant 0 : i32
    return %arg0, %c0_i32 : i32, i32
  }
  func.func @transform_1(%arg0: i32, %arg1: i32) -> (i32, i32) {
    %c0_i32 = arith.constant 0 : i32
    %c0_i32_0 = arith.constant 0 : i32
    return %arg1, %c0_i32 : i32, i32
  }
  func.func @transform_2(%arg0: i32, %arg1: i32) -> (i32, i32) {
    %c0_i32 = arith.constant 0 : i32
    return %arg0, %arg1 : i32, i32
  }
}

</mosaic_0001>

<llo_original>
// kernel: tpu_custom_call.1
$region0: #{tpu_custom_call.1}
  #allocation0 [shape = 'u32[]', space=smem, size = 0x4, offset = 0x4, fixed_abs, tag = 'smem constant byte address 0x4 - core index']
  #allocation1 [shape = 'u32[144,128]{1,0:T(1,128)}', space=vmem, size = 0x12000, scoped, tag = 'internal scratch']
  %s0 = inlined_call_operand.vmem [shape: bf16[256,64], index: 0, kind: input, shape index: {}]
  %s1 = inlined_call_operand.vmem [shape: bf16[256,64], index: 1, kind: input, shape index: {}]
  %s2 = inlined_call_operand.hbm [shape: f32[256,256], index: 2, kind: output, shape index: {}]
  %s3 = sld [smem:[#allocation0]]
  $region18: #{tpu_custom_call.1} parent=0
    _
  %s5 = ssub.s32 1, %s3
  %s6 = scalar_select 0, %s5, %s3
  $region1: #{tpu_custom_call.1} parent=0
    #allocation2 [shape = 'u8[262144]{0}', space=vmem, size = 0x40000, scoped, tag = 'output window, operand 0, single buffered']
    #allocation3 [shape = 's32[1]{0}', space=sflag, size = 0x4, scoped, tag = 'scoped memory for tpu_custom_call.1']
    %7 = vsyncpa [#allocation3], 0
    // Predicated region
    $region2: #{tpu_custom_call.1} parent=1 // pred_check
      _
    $region3: #{tpu_custom_call.1} parent=1 // pred_check_branch
      %9 = sbr.rel (0) target = $region5
    $region4: #{tpu_custom_call.1} parent=1 // pred_region
      _
    $region5: #{tpu_custom_call.1} parent=1 // pred_fallthru
      _
    // Predicated region
    $region6: #{tpu_custom_call.1} parent=1 // pred_check
      _
    $region7: #{tpu_custom_call.1} parent=1 // pred_check_branch
      %11 = sbr.rel (0) target = $region9
    $region8: #{tpu_custom_call.1} parent=1 // pred_region
      _
    $region9: #{tpu_custom_call.1} parent=1 // pred_fallthru
      _
    %v13 = vld [vmem:[%s0] sm:$0xf]
    %v14 = vld [vmem:[%s0 + $0x4] sm:$0xf]
    %v15 = vld [vmem:[%s0 + $0x8] sm:$0xf]
    %v16 = vld [vmem:[%s0 + $0xc] sm:$0xf]
    %v17 = vld [vmem:[%s0 + $0x10] sm:$0xf]
    %v18 = vld [vmem:[%s0 + $0x14] sm:$0xf]
    %v19 = vld [vmem:[%s0 + $0x18] sm:$0xf]
    %v20 = vld [vmem:[%s0 + $0x1c] sm:$0xf]
    %v21 = vld [vmem:[%s0 + $0x20] sm:$0xf]
    %v22 = vld [vmem:[%s0 + $0x24] sm:$0xf]
    %v23 = vld [vmem:[%s0 + $0x28] sm:$0xf]
    %v24 = vld [vmem:[%s0 + $0x2c] sm:$0xf]
    %v25 = vld [vmem:[%s0 + $0x30] sm:$0xf]
    %v26 = vld [vmem:[%s0 + $0x34] sm:$0xf]
    %v27 = vld [vmem:[%s0 + $0x38] sm:$0xf]
    %v28 = vld [vmem:[%s0 + $0x3c] sm:$0xf]
    %v29 = vld [vmem:[%s0 + $0x40] sm:$0xf]
    %v30 = vld [vmem:[%s0 + $0x44] sm:$0xf]
    %v31 = vld [vmem:[%s0 + $0x48] sm:$0xf]
    %v32 = vld [vmem:[%s0 + $0x4c] sm:$0xf]
    %v33 = vld [vmem:[%s0 + $0x50] sm:$0xf]
    %v34 = vld [vmem:[%s0 + $0x54] sm:$0xf]
    %v35 = vld [vmem:[%s0 + $0x58] sm:$0xf]
    %v36 = vld [vmem:[%s0 + $0x5c] sm:$0xf]
    %v37 = vld [vmem:[%s0 + $0x60] sm:$0xf]
    %v38 = vld [vmem:[%s0 + $0x64] sm:$0xf]
    %v39 = vld [vmem:[%s0 + $0x68] sm:$0xf]
    %v40 = vld [vmem:[%s0 + $0x6c] sm:$0xf]
    %v41 = vld [vmem:[%s0 + $0x70] sm:$0xf]
    %v42 = vld [vmem:[%s0 + $0x74] sm:$0xf]
    %v43 = vld [vmem:[%s0 + $0x78] sm:$0xf]
    %v44 = vld [vmem:[%s0 + $0x7c] sm:$0xf]
    %v45 = vld [vmem:[%s1] sm:$0xf]
    %v46 = vld [vmem:[%s1 + $0x4] sm:$0xf]
    %v47 = vld [vmem:[%s1 + $0x8] sm:$0xf]
    %v48 = vld [vmem:[%s1 + $0xc] sm:$0xf]
    %v49 = vld [vmem:[%s1 + $0x10] sm:$0xf]
    %v50 = vld [vmem:[%s1 + $0x14] sm:$0xf]
    %v51 = vld [vmem:[%s1 + $0x18] sm:$0xf]
    %v52 = vld [vmem:[%s1 + $0x1c] sm:$0xf]
    %v53 = vld [vmem:[%s1 + $0x20] sm:$0xf]
    %v54 = vld [vmem:[%s1 + $0x24] sm:$0xf]
    %v55 = vld [vmem:[%s1 + $0x28] sm:$0xf]
    %v56 = vld [vmem:[%s1 + $0x2c] sm:$0xf]
    %v57 = vld [vmem:[%s1 + $0x30] sm:$0xf]
    %v58 = vld [vmem:[%s1 + $0x34] sm:$0xf]
    %v59 = vld [vmem:[%s1 + $0x38] sm:$0xf]
    %v60 = vld [vmem:[%s1 + $0x3c] sm:$0xf]
    %v61 = vld [vmem:[%s1 + $0x40] sm:$0xf]
    %v62 = vld [vmem:[%s1 + $0x44] sm:$0xf]
    %v63 = vld [vmem:[%s1 + $0x48] sm:$0xf]
    %v64 = vld [vmem:[%s1 + $0x4c] sm:$0xf]
    %v65 = vld [vmem:[%s1 + $0x50] sm:$0xf]
    %v66 = vld [vmem:[%s1 + $0x54] sm:$0xf]
    %v67 = vld [vmem:[%s1 + $0x58] sm:$0xf]
    %v68 = vld [vmem:[%s1 + $0x5c] sm:$0xf]
    %v69 = vld [vmem:[%s1 + $0x60] sm:$0xf]
    %v70 = vld [vmem:[%s1 + $0x64] sm:$0xf]
    %v71 = vld [vmem:[%s1 + $0x68] sm:$0xf]
    %v72 = vld [vmem:[%s1 + $0x6c] sm:$0xf]
    %v73 = vld [vmem:[%s1 + $0x70] sm:$0xf]
    %v74 = vld [vmem:[%s1 + $0x74] sm:$0xf]
    %v75 = vld [vmem:[%s1 + $0x78] sm:$0xf]
    %v76 = vld [vmem:[%s1 + $0x7c] sm:$0xf]
    %v109 = vunpack.c.l.b16 %v13
    %v110 = vunpack.c.l.b16 %v14
    %v111 = vunpack.c.l.b16 %v15
    %v112 = vunpack.c.l.b16 %v16
    %v113 = vunpack.c.l.b16 %v17
    %v114 = vunpack.c.l.b16 %v18
    %v115 = vunpack.c.l.b16 %v19
    %v116 = vunpack.c.l.b16 %v20
    %v117 = vunpack.c.l.b16 %v21
    %v118 = vunpack.c.l.b16 %v22
    %v119 = vunpack.c.l.b16 %v23
    %v120 = vunpack.c.l.b16 %v24
    %v121 = vunpack.c.l.b16 %v25
    %v122 = vunpack.c.l.b16 %v26
    %v123 = vunpack.c.l.b16 %v27
    %v124 = vunpack.c.l.b16 %v28
    %v125 = vunpack.c.l.b16 %v29
    %v126 = vunpack.c.l.b16 %v30
    %v127 = vunpack.c.l.b16 %v31
    %v128 = vunpack.c.l.b16 %v32
    %v129 = vunpack.c.l.b16 %v33
    %v130 = vunpack.c.l.b16 %v34
    %v131 = vunpack.c.l.b16 %v35
    %v132 = vunpack.c.l.b16 %v36
    %v133 = vunpack.c.l.b16 %v37
    %v134 = vunpack.c.l.b16 %v38
    %v135 = vunpack.c.l.b16 %v39
    %v136 = vunpack.c.l.b16 %v40
    %v137 = vunpack.c.l.b16 %v41
    %v138 = vunpack.c.l.b16 %v42
    %v139 = vunpack.c.l.b16 %v43
    %v140 = vunpack.c.l.b16 %v44
    %v141 = vpack.c.b16 %v110, %v109
    %v142 = vpack.c.b16 %v112, %v111
    %v143 = vpack.c.b16 %v114, %v113
    %v144 = vpack.c.b16 %v116, %v115
    %v145 = vpack.c.b16 %v118, %v117
    %v146 = vpack.c.b16 %v120, %v119
    %v147 = vpack.c.b16 %v122, %v121
    %v148 = vpack.c.b16 %v124, %v123
    %v149 = vpack.c.b16 %v126, %v125
    %v150 = vpack.c.b16 %v128, %v127
    %v151 = vpack.c.b16 %v130, %v129
    %v152 = vpack.c.b16 %v132, %v131
    %v153 = vpack.c.b16 %v134, %v133
    %v154 = vpack.c.b16 %v136, %v135
    %v155 = vpack.c.b16 %v138, %v137
    %v156 = vpack.c.b16 %v140, %v139
    %v189 = vunpack.c.l.b16 %v45
    %v190 = vunpack.c.l.b16 %v46
    %v191 = vunpack.c.l.b16 %v47
    %v192 = vunpack.c.l.b16 %v48
    %v193 = vunpack.c.l.b16 %v49
    %v194 = vunpack.c.l.b16 %v50
    %v195 = vunpack.c.l.b16 %v51
    %v196 = vunpack.c.l.b16 %v52
    %v197 = vunpack.c.l.b16 %v53
    %v198 = vunpack.c.l.b16 %v54
    %v199 = vunpack.c.l.b16 %v55
    %v200 = vunpack.c.l.b16 %v56
    %v201 = vunpack.c.l.b16 %v57
    %v202 = vunpack.c.l.b16 %v58
    %v203 = vunpack.c.l.b16 %v59
    %v204 = vunpack.c.l.b16 %v60
    %v205 = vunpack.c.l.b16 %v61
    %v206 = vunpack.c.l.b16 %v62
    %v207 = vunpack.c.l.b16 %v63
    %v208 = vunpack.c.l.b16 %v64
    %v209 = vunpack.c.l.b16 %v65
    %v210 = vunpack.c.l.b16 %v66
    %v211 = vunpack.c.l.b16 %v67
    %v212 = vunpack.c.l.b16 %v68
    %v213 = vunpack.c.l.b16 %v69
    %v214 = vunpack.c.l.b16 %v70
    %v215 = vunpack.c.l.b16 %v71
    %v216 = vunpack.c.l.b16 %v72
    %v217 = vunpack.c.l.b16 %v73
    %v218 = vunpack.c.l.b16 %v74
    %v219 = vunpack.c.l.b16 %v75
    %v220 = vunpack.c.l.b16 %v76
    %v221 = vpack.c.b16 %v190, %v189
    %v222 = vpack.c.b16 %v192, %v191
    %v223 = vpack.c.b16 %v194, %v193
    %v224 = vpack.c.b16 %v196, %v195
    %v225 = vpack.c.b16 %v198, %v197
    %v226 = vpack.c.b16 %v200, %v199
    %v227 = vpack.c.b16 %v202, %v201
    %v228 = vpack.c.b16 %v204, %v203
    %v229 = vpack.c.b16 %v206, %v205
    %v230 = vpack.c.b16 %v208, %v207
    %v231 = vpack.c.b16 %v210, %v209
    %v232 = vpack.c.b16 %v212, %v211
    %v233 = vpack.c.b16 %v214, %v213
    %v234 = vpack.c.b16 %v216, %v215
    %v235 = vpack.c.b16 %v218, %v217
    %v236 = vpack.c.b16 %v220, %v219
    %vm237 = vcmask 523264
    %v239 = vsel %vm237, %v141, 0
    %v242 = vsel %vm237, %v142, 0
    %v245 = vsel %vm237, %v143, 0
    %v248 = vsel %vm237, %v144, 0
    %v251 = vsel %vm237, %v145, 0
    %v254 = vsel %vm237, %v146, 0
    %v257 = vsel %vm237, %v147, 0
    %v260 = vsel %vm237, %v148, 0
    %v263 = vsel %vm237, %v149, 0
    %v266 = vsel %vm237, %v150, 0
    %v269 = vsel %vm237, %v151, 0
    %v272 = vsel %vm237, %v152, 0
    %v275 = vsel %vm237, %v153, 0
    %v278 = vsel %vm237, %v154, 0
    %v281 = vsel %vm237, %v155, 0
    %v284 = vsel %vm237, %v156, 0
    %v287 = vsel %vm237, %v221, 0
    %v290 = vsel %vm237, %v222, 0
    %v293 = vsel %vm237, %v223, 0
    %v296 = vsel %vm237, %v224, 0
    %v299 = vsel %vm237, %v225, 0
    %v302 = vsel %vm237, %v226, 0
    %v305 = vsel %vm237, %v227, 0
    %v308 = vsel %vm237, %v228, 0
    %v311 = vsel %vm237, %v229, 0
    %v314 = vsel %vm237, %v230, 0
    %v317 = vsel %vm237, %v231, 0
    %v320 = vsel %vm237, %v232, 0
    %v323 = vsel %vm237, %v233, 0
    %v326 = vsel %vm237, %v234, 0
    %v329 = vsel %vm237, %v235, 0
    %v332 = vsel %vm237, %v236, 0
    %334 = vmatprep.subr.bf16.mxu0 0
    %335 = vmatpush1.bf16.xpose.msra.mxu0 %v308
    %336 = vmatprep.subr.bf16.mxu0 0
    %337 = vmatpush1.bf16.xpose.msra.mxu0 %v305
    %338 = vmatprep.subr.bf16.mxu0 0
    %339 = vmatpush1.bf16.xpose.msra.mxu0 %v302
    %340 = vmatprep.subr.bf16.mxu0 0
    %341 = vmatpush1.bf16.xpose.msra.mxu0 %v299
    %342 = vmatprep.subr.bf16.mxu0 0
    %343 = vmatpush1.bf16.xpose.msra.mxu0 %v296
    %344 = vmatprep.subr.bf16.mxu0 0
    %345 = vmatpush1.bf16.xpose.msra.mxu0 %v293
    %346 = vmatprep.subr.bf16.mxu0 0
    %347 = vmatpush1.bf16.xpose.msra.mxu0 %v290
    %348 = vmatprep.subr.bf16.mxu0 0
    %349 = vmatpush1.bf16.xpose.msra.mxu0 %v287
    %350 = vmatprep.subr.bf16.mxu0 0
    %351 = vmatpush2.bf16.xpose.msra.mxu0 %v332
    %352 = vmatprep.subr.bf16.mxu0 0
    %353 = vmatpush2.bf16.xpose.msra.mxu0 %v329
    %354 = vmatprep.subr.bf16.mxu0 0
    %355 = vmatpush2.bf16.xpose.msra.mxu0 %v326
    %356 = vmatprep.subr.bf16.mxu0 0
    %357 = vmatpush2.bf16.xpose.msra.mxu0 %v323
    %358 = vmatprep.subr.bf16.mxu0 0
    %359 = vmatpush2.bf16.xpose.msra.mxu0 %v320
    %360 = vmatprep.subr.bf16.mxu0 0
    %361 = vmatpush2.bf16.xpose.msra.mxu0 %v317
    %362 = vmatprep.subr.bf16.mxu0 0
    %363 = vmatpush2.bf16.xpose.msra.mxu0 %v314
    %364 = vmatprep.subr.bf16.mxu0 0
    %365 = vmatpush2.bf16.xpose.msra.mxu0 %v311
    %366 = vmatprep.mubr.bf16.mxu0 0
    %367 = vmatmul.mubr.bf16.gmra.mxu0 %v239
    %v368 = vpop.f32.mrf.mxu0
    %v369 = vadd.f32 0.0, %v368
    %v370 = vpop.f32.mrf.mxu0
    %v371 = vadd.f32 0.0, %v370
    %v372 = vpop.f32.mrf.mxu0
    %v373 = vadd.f32 0.0, %v372
    %v374 = vpop.f32.mrf.mxu0
    %v375 = vadd.f32 0.0, %v374
    %376 = vmatprep.mubr.bf16.mxu0 0
    %377 = vmatmul.mubr.bf16.gmra.mxu0 %v242
    %v378 = vpop.f32.mrf.mxu0
    %v379 = vadd.f32 0.0, %v378
    %v380 = vpop.f32.mrf.mxu0
    %v381 = vadd.f32 0.0, %v380
    %v382 = vpop.f32.mrf.mxu0
    %v383 = vadd.f32 0.0, %v382
    %v384 = vpop.f32.mrf.mxu0
    %v385 = vadd.f32 0.0, %v384
    %386 = vmatprep.mubr.bf16.mxu0 0
    %387 = vmatmul.mubr.bf16.gmra.mxu0 %v245
    %v388 = vpop.f32.mrf.mxu0
    %v389 = vadd.f32 0.0, %v388
    %v390 = vpop.f32.mrf.mxu0
    %v391 = vadd.f32 0.0, %v390
    %v392 = vpop.f32.mrf.mxu0
    %v393 = vadd.f32 0.0, %v392
    %v394 = vpop.f32.mrf.mxu0
    %v395 = vadd.f32 0.0, %v394
    %396 = vmatprep.mubr.bf16.mxu0 0
    %397 = vmatmul.mubr.bf16.gmra.mxu0 %v248
    %v398 = vpop.f32.mrf.mxu0
    %v399 = vadd.f32 0.0, %v398
    %v400 = vpop.f32.mrf.mxu0
    %v401 = vadd.f32 0.0, %v400
    %v402 = vpop.f32.mrf.mxu0
    %v403 = vadd.f32 0.0, %v402
    %v404 = vpop.f32.mrf.mxu0
    %v405 = vadd.f32 0.0, %v404
    %406 = vmatprep.mubr.bf16.mxu0 0
    %407 = vmatmul.mubr.bf16.gmra.mxu0 %v251
    %v408 = vpop.f32.mrf.mxu0
    %v409 = vadd.f32 0.0, %v408
    %v410 = vpop.f32.mrf.mxu0
    %v411 = vadd.f32 0.0, %v410
    %v412 = vpop.f32.mrf.mxu0
    %v413 = vadd.f32 0.0, %v412
    %v414 = vpop.f32.mrf.mxu0
    %v415 = vadd.f32 0.0, %v414
    %416 = vmatprep.mubr.bf16.mxu0 0
    %417 = vmatmul.mubr.bf16.gmra.mxu0 %v254
    %v418 = vpop.f32.mrf.mxu0
    %v419 = vadd.f32 0.0, %v418
    %v420 = vpop.f32.mrf.mxu0
    %v421 = vadd.f32 0.0, %v420
    %v422 = vpop.f32.mrf.mxu0
    %v423 = vadd.f32 0.0, %v422
    %v424 = vpop.f32.mrf.mxu0
    %v425 = vadd.f32 0.0, %v424
    %426 = vmatprep.mubr.bf16.mxu0 0
    %427 = vmatmul.mubr.bf16.gmra.mxu0 %v257
    %v428 = vpop.f32.mrf.mxu0
    %v429 = vadd.f32 0.0, %v428
    %v430 = vpop.f32.mrf.mxu0
    %v431 = vadd.f32 0.0, %v430
    %v432 = vpop.f32.mrf.mxu0
    %v433 = vadd.f32 0.0, %v432
    %v434 = vpop.f32.mrf.mxu0
    %v435 = vadd.f32 0.0, %v434
    %436 = vmatprep.mubr.bf16.mxu0 0
    %437 = vmatmul.mubr.bf16.gmra.mxu0 %v260
    %v438 = vpop.f32.mrf.mxu0
    %v439 = vadd.f32 0.0, %v438
    %v440 = vpop.f32.mrf.mxu0
    %v441 = vadd.f32 0.0, %v440
    %v442 = vpop.f32.mrf.mxu0
    %v443 = vadd.f32 0.0, %v442
    %v444 = vpop.f32.mrf.mxu0
    %v445 = vadd.f32 0.0, %v444
    %446 = vmatprep.mubr.bf16.mxu0 0
    %447 = vmatmul.mubr.bf16.gmra.mxu0 %v263
    %v448 = vpop.f32.mrf.mxu0
    %v449 = vadd.f32 0.0, %v448
    %v450 = vpop.f32.mrf.mxu0
    %v451 = vadd.f32 0.0, %v450
    %v452 = vpop.f32.mrf.mxu0
    %v453 = vadd.f32 0.0, %v452
    %v454 = vpop.f32.mrf.mxu0
    %v455 = vadd.f32 0.0, %v454
    %456 = vmatprep.mubr.bf16.mxu0 0
    %457 = vmatmul.mubr.bf16.gmra.mxu0 %v266
    %v458 = vpop.f32.mrf.mxu0
    %v459 = vadd.f32 0.0, %v458
    %v460 = vpop.f32.mrf.mxu0
    %v461 = vadd.f32 0.0, %v460
    %v462 = vpop.f32.mrf.mxu0
    %v463 = vadd.f32 0.0, %v462
    %v464 = vpop.f32.mrf.mxu0
    %v465 = vadd.f32 0.0, %v464
    %466 = vmatprep.mubr.bf16.mxu0 0
    %467 = vmatmul.mubr.bf16.gmra.mxu0 %v269
    %v468 = vpop.f32.mrf.mxu0
    %v469 = vadd.f32 0.0, %v468
    %v470 = vpop.f32.mrf.mxu0
    %v471 = vadd.f32 0.0, %v470
    %v472 = vpop.f32.mrf.mxu0
    %v473 = vadd.f32 0.0, %v472
    %v474 = vpop.f32.mrf.mxu0
    %v475 = vadd.f32 0.0, %v474
    %476 = vmatprep.mubr.bf16.mxu0 0
    %477 = vmatmul.mubr.bf16.gmra.mxu0 %v272
    %v478 = vpop.f32.mrf.mxu0
    %v479 = vadd.f32 0.0, %v478
    %v480 = vpop.f32.mrf.mxu0
    %v481 = vadd.f32 0.0, %v480
    %v482 = vpop.f32.mrf.mxu0
    %v483 = vadd.f32 0.0, %v482
    %v484 = vpop.f32.mrf.mxu0
    %v485 = vadd.f32 0.0, %v484
    %486 = vmatprep.mubr.bf16.mxu0 0
    %487 = vmatmul.mubr.bf16.gmra.mxu0 %v275
    %v488 = vpop.f32.mrf.mxu0
    %v489 = vadd.f32 0.0, %v488
    %v490 = vpop.f32.mrf.mxu0
    %v491 = vadd.f32 0.0, %v490
    %v492 = vpop.f32.mrf.mxu0
    %v493 = vadd.f32 0.0, %v492
    %v494 = vpop.f32.mrf.mxu0
    %v495 = vadd.f32 0.0, %v494
    %496 = vmatprep.mubr.bf16.mxu0 0
    %497 = vmatmul.mubr.bf16.gmra.mxu0 %v278
    %v498 = vpop.f32.mrf.mxu0
    %v499 = vadd.f32 0.0, %v498
    %v500 = vpop.f32.mrf.mxu0
    %v501 = vadd.f32 0.0, %v500
    %v502 = vpop.f32.mrf.mxu0
    %v503 = vadd.f32 0.0, %v502
    %v504 = vpop.f32.mrf.mxu0
    %v505 = vadd.f32 0.0, %v504
    %506 = vmatprep.mubr.bf16.mxu0 0
    %507 = vmatmul.mubr.bf16.gmra.mxu0 %v281
    %v508 = vpop.f32.mrf.mxu0
    %v509 = vadd.f32 0.0, %v508
    %v510 = vpop.f32.mrf.mxu0
    %v511 = vadd.f32 0.0, %v510
    %v512 = vpop.f32.mrf.mxu0
    %v513 = vadd.f32 0.0, %v512
    %v514 = vpop.f32.mrf.mxu0
    %v515 = vadd.f32 0.0, %v514
    %516 = vmatprep.mubr.bf16.mxu0 0
    %517 = vmatmul.mubr.bf16.gmra.mxu0 %v284
    %v518 = vpop.f32.mrf.mxu0
    %v519 = vadd.f32 0.0, %v518
    %v520 = vpop.f32.mrf.mxu0
    %v521 = vadd.f32 0.0, %v520
    %v522 = vpop.f32.mrf.mxu0
    %v523 = vadd.f32 0.0, %v522
    %v524 = vpop.f32.mrf.mxu0
    %v525 = vadd.f32 0.0, %v524
    %526 = vdwg.mxu0
    %v527 = vsub.f32 0.0, %v369
    %v528 = vsub.f32 0.0, %v371
    %v529 = vsub.f32 0.0, %v373
    %v530 = vsub.f32 0.0, %v375
    %v531 = vsub.f32 0.0, %v379
    %v532 = vsub.f32 0.0, %v381
    %v533 = vsub.f32 0.0, %v383
    %v534 = vsub.f32 0.0, %v385
    %v535 = vsub.f32 0.0, %v389
    %v536 = vsub.f32 0.0, %v391
    %v537 = vsub.f32 0.0, %v393
    %v538 = vsub.f32 0.0, %v395
    %v539 = vsub.f32 0.0, %v399
    %v540 = vsub.f32 0.0, %v401
    %v541 = vsub.f32 0.0, %v403
    %v542 = vsub.f32 0.0, %v405
    %v543 = vsub.f32 0.0, %v409
    %v544 = vsub.f32 0.0, %v411
    %v545 = vsub.f32 0.0, %v413
    %v546 = vsub.f32 0.0, %v415
    %v547 = vsub.f32 0.0, %v419
    %v548 = vsub.f32 0.0, %v421
    %v549 = vsub.f32 0.0, %v423
    %v550 = vsub.f32 0.0, %v425
    %v551 = vsub.f32 0.0, %v429
    %v552 = vsub.f32 0.0, %v431
    %v553 = vsub.f32 0.0, %v433
    %v554 = vsub.f32 0.0, %v435
    %v555 = vsub.f32 0.0, %v439
    %v556 = vsub.f32 0.0, %v441
    %v557 = vsub.f32 0.0, %v443
    %v558 = vsub.f32 0.0, %v445
    %v559 = vsub.f32 0.0, %v449
    %v560 = vsub.f32 0.0, %v451
    %v561 = vsub.f32 0.0, %v453
    %v562 = vsub.f32 0.0, %v455
    %v563 = vsub.f32 0.0, %v459
    %v564 = vsub.f32 0.0, %v461
    %v565 = vsub.f32 0.0, %v463
    %v566 = vsub.f32 0.0, %v465
    %v567 = vsub.f32 0.0, %v469
    %v568 = vsub.f32 0.0, %v471
    %v569 = vsub.f32 0.0, %v473
    %v570 = vsub.f32 0.0, %v475
    %v571 = vsub.f32 0.0, %v479
    %v572 = vsub.f32 0.0, %v481
    %v573 = vsub.f32 0.0, %v483
    %v574 = vsub.f32 0.0, %v485
    %v575 = vsub.f32 0.0, %v489
    %v576 = vsub.f32 0.0, %v491
    %v577 = vsub.f32 0.0, %v493
    %v578 = vsub.f32 0.0, %v495
    %v579 = vsub.f32 0.0, %v499
    %v580 = vsub.f32 0.0, %v501
    %v581 = vsub.f32 0.0, %v503
    %v582 = vsub.f32 0.0, %v505
    %v583 = vsub.f32 0.0, %v509
    %v584 = vsub.f32 0.0, %v511
    %v585 = vsub.f32 0.0, %v513
    %v586 = vsub.f32 0.0, %v515
    %v587 = vsub.f32 0.0, %v519
    %v588 = vsub.f32 0.0, %v521
    %v589 = vsub.f32 0.0, %v523
    %v590 = vsub.f32 0.0, %v525
    %v591 = vmul.f32 %v527, 1.442695
    %v592 = vpow.pop %v591
    %v593 = vmul.f32 %v528, 1.442695
    %v594 = vpow.pop %v593
    %v595 = vmul.f32 %v529, 1.442695
    %v596 = vpow.pop %v595
    %v597 = vmul.f32 %v530, 1.442695
    %v598 = vpow.pop %v597
    %v599 = vmul.f32 %v531, 1.442695
    %v600 = vpow.pop %v599
    %v601 = vmul.f32 %v532, 1.442695
    %v602 = vpow.pop %v601
    %v603 = vmul.f32 %v533, 1.442695
    %v604 = vpow.pop %v603
    %v605 = vmul.f32 %v534, 1.442695
    %v606 = vpow.pop %v605
    %v607 = vmul.f32 %v535, 1.442695
    %v608 = vpow.pop %v607
    %v609 = vmul.f32 %v536, 1.442695
    %v610 = vpow.pop %v609
    %v611 = vmul.f32 %v537, 1.442695
    %v612 = vpow.pop %v611
    %v613 = vmul.f32 %v538, 1.442695
    %v614 = vpow.pop %v613
    %v615 = vmul.f32 %v539, 1.442695
    %v616 = vpow.pop %v615
    %v617 = vmul.f32 %v540, 1.442695
    %v618 = vpow.pop %v617
    %v619 = vmul.f32 %v541, 1.442695
    %v620 = vpow.pop %v619
    %v621 = vmul.f32 %v542, 1.442695
    %v622 = vpow.pop %v621
    %v623 = vmul.f32 %v543, 1.442695
    %v624 = vpow.pop %v623
    %v625 = vmul.f32 %v544, 1.442695
    %v626 = vpow.pop %v625
    %v627 = vmul.f32 %v545, 1.442695
    %v628 = vpow.pop %v627
    %v629 = vmul.f32 %v546, 1.442695
    %v630 = vpow.pop %v629
    %v631 = vmul.f32 %v547, 1.442695
    %v632 = vpow.pop %v631
    %v633 = vmul.f32 %v548, 1.442695
    %v634 = vpow.pop %v633
    %v635 = vmul.f32 %v549, 1.442695
    %v636 = vpow.pop %v635
    %v637 = vmul.f32 %v550, 1.442695
    %v638 = vpow.pop %v637
    %v639 = vmul.f32 %v551, 1.442695
    %v640 = vpow.pop %v639
    %v641 = vmul.f32 %v552, 1.442695
    %v642 = vpow.pop %v641
    %v643 = vmul.f32 %v553, 1.442695
    %v644 = vpow.pop %v643
    %v645 = vmul.f32 %v554, 1.442695
    %v646 = vpow.pop %v645
    %v647 = vmul.f32 %v555, 1.442695
    %v648 = vpow.pop %v647
    %v649 = vmul.f32 %v556, 1.442695
    %v650 = vpow.pop %v649
    %v651 = vmul.f32 %v557, 1.442695
    %v652 = vpow.pop %v651
    %v653 = vmul.f32 %v558, 1.442695
    %v654 = vpow.pop %v653
    %v655 = vmul.f32 %v559, 1.442695
    %v656 = vpow.pop %v655
    %v657 = vmul.f32 %v560, 1.442695
    %v658 = vpow.pop %v657
    %v659 = vmul.f32 %v561, 1.442695
    %v660 = vpow.pop %v659
    %v661 = vmul.f32 %v562, 1.442695
    %v662 = vpow.pop %v661
    %v663 = vmul.f32 %v563, 1.442695
    %v664 = vpow.pop %v663
    %v665 = vmul.f32 %v564, 1.442695
    %v666 = vpow.pop %v665
    %v667 = vmul.f32 %v565, 1.442695
    %v668 = vpow.pop %v667
    %v669 = vmul.f32 %v566, 1.442695
    %v670 = vpow.pop %v669
    %v671 = vmul.f32 %v567, 1.442695
    %v672 = vpow.pop %v671
    %v673 = vmul.f32 %v568, 1.442695
    %v674 = vpow.pop %v673
    %v675 = vmul.f32 %v569, 1.442695
    %v676 = vpow.pop %v675
    %v677 = vmul.f32 %v570, 1.442695
    %v678 = vpow.pop %v677
    %v679 = vmul.f32 %v571, 1.442695
    %v680 = vpow.pop %v679
    %v681 = vmul.f32 %v572, 1.442695
    %v682 = vpow.pop %v681
    %v683 = vmul.f32 %v573, 1.442695
    %v684 = vpow.pop %v683
    %v685 = vmul.f32 %v574, 1.442695
    %v686 = vpow.pop %v685
    %v687 = vmul.f32 %v575, 1.442695
    %v688 = vpow.pop %v687
    %v689 = vmul.f32 %v576, 1.442695
    %v690 = vpow.pop %v689
    %v691 = vmul.f32 %v577, 1.442695
    %v692 = vpow.pop %v691
    %v693 = vmul.f32 %v578, 1.442695
    %v694 = vpow.pop %v693
    %v695 = vmul.f32 %v579, 1.442695
    %v696 = vpow.pop %v695
    %v697 = vmul.f32 %v580, 1.442695
    %v698 = vpow.pop %v697
    %v699 = vmul.f32 %v581, 1.442695
    %v700 = vpow.pop %v699
    %v701 = vmul.f32 %v582, 1.442695
    %v702 = vpow.pop %v701
    %v703 = vmul.f32 %v583, 1.442695
    %v704 = vpow.pop %v703
    %v705 = vmul.f32 %v584, 1.442695
    %v706 = vpow.pop %v705
    %v707 = vmul.f32 %v585, 1.442695
    %v708 = vpow.pop %v707
    %v709 = vmul.f32 %v586, 1.442695
    %v710 = vpow.pop %v709
    %v711 = vmul.f32 %v587, 1.442695
    %v712 = vpow.pop %v711
    %v713 = vmul.f32 %v588, 1.442695
    %v714 = vpow.pop %v713
    %v715 = vmul.f32 %v589, 1.442695
    %v716 = vpow.pop %v715
    %v717 = vmul.f32 %v590, 1.442695
    %v718 = vpow.pop %v717
    %v719 = vadd.f32 %v592, 1.0
    %v720 = vadd.f32 %v594, 1.0
    %v721 = vadd.f32 %v596, 1.0
    %v722 = vadd.f32 %v598, 1.0
    %v723 = vadd.f32 %v600, 1.0
    %v724 = vadd.f32 %v602, 1.0
    %v725 = vadd.f32 %v604, 1.0
    %v726 = vadd.f32 %v606, 1.0
    %v727 = vadd.f32 %v608, 1.0
    %v728 = vadd.f32 %v610, 1.0
    %v729 = vadd.f32 %v612, 1.0
    %v730 = vadd.f32 %v614, 1.0
    %v731 = vadd.f32 %v616, 1.0
    %v732 = vadd.f32 %v618, 1.0
    %v733 = vadd.f32 %v620, 1.0
    %v734 = vadd.f32 %v622, 1.0
    %v735 = vadd.f32 %v624, 1.0
    %v736 = vadd.f32 %v626, 1.0
    %v737 = vadd.f32 %v628, 1.0
    %v738 = vadd.f32 %v630, 1.0
    %v739 = vadd.f32 %v632, 1.0
    %v740 = vadd.f32 %v634, 1.0
    %v741 = vadd.f32 %v636, 1.0
    %v742 = vadd.f32 %v638, 1.0
    %v743 = vadd.f32 %v640, 1.0
    %v744 = vadd.f32 %v642, 1.0
    %v745 = vadd.f32 %v644, 1.0
    %v746 = vadd.f32 %v646, 1.0
    %v747 = vadd.f32 %v648, 1.0
    %v748 = vadd.f32 %v650, 1.0
    %v749 = vadd.f32 %v652, 1.0
    %v750 = vadd.f32 %v654, 1.0
    %v751 = vadd.f32 %v656, 1.0
    %v752 = vadd.f32 %v658, 1.0
    %v753 = vadd.f32 %v660, 1.0
    %v754 = vadd.f32 %v662, 1.0
    %v755 = vadd.f32 %v664, 1.0
    %v756 = vadd.f32 %v666, 1.0
    %v757 = vadd.f32 %v668, 1.0
    %v758 = vadd.f32 %v670, 1.0
    %v759 = vadd.f32 %v672, 1.0
    %v760 = vadd.f32 %v674, 1.0
    %v761 = vadd.f32 %v676, 1.0
    %v762 = vadd.f32 %v678, 1.0
    %v763 = vadd.f32 %v680, 1.0
    %v764 = vadd.f32 %v682, 1.0
    %v765 = vadd.f32 %v684, 1.0
    %v766 = vadd.f32 %v686, 1.0
    %v767 = vadd.f32 %v688, 1.0
    %v768 = vadd.f32 %v690, 1.0
    %v769 = vadd.f32 %v692, 1.0
    %v770 = vadd.f32 %v694, 1.0
    %v771 = vadd.f32 %v696, 1.0
    %v772 = vadd.f32 %v698, 1.0
    %v773 = vadd.f32 %v700, 1.0
    %v774 = vadd.f32 %v702, 1.0
    %v775 = vadd.f32 %v704, 1.0
    %v776 = vadd.f32 %v706, 1.0
    %v777 = vadd.f32 %v708, 1.0
    %v778 = vadd.f32 %v710, 1.0
    %v779 = vadd.f32 %v712, 1.0
    %v780 = vadd.f32 %v714, 1.0
    %v781 = vadd.f32 %v716, 1.0
    %v782 = vadd.f32 %v718, 1.0
    %v783 = vrcp.pop %v719
    %v784 = vrcp.pop %v720
    %v785 = vrcp.pop %v721
    %v786 = vrcp.pop %v722
    %v787 = vrcp.pop %v723
    %v788 = vrcp.pop %v724
    %v789 = vrcp.pop %v725
    %v790 = vrcp.pop %v726
    %v791 = vrcp.pop %v727
    %v792 = vrcp.pop %v728
    %v793 = vrcp.pop %v729
    %v794 = vrcp.pop %v730
    %v795 = vrcp.pop %v731
    %v796 = vrcp.pop %v732
    %v797 = vrcp.pop %v733
    %v798 = vrcp.pop %v734
    %v799 = vrcp.pop %v735
    %v800 = vrcp.pop %v736
    %v801 = vrcp.pop %v737
    %v802 = vrcp.pop %v738
    %v803 = vrcp.pop %v739
    %v804 = vrcp.pop %v740
    %v805 = vrcp.pop %v741
    %v806 = vrcp.pop %v742
    %v807 = vrcp.pop %v743
    %v808 = vrcp.pop %v744
    %v809 = vrcp.pop %v745
    %v810 = vrcp.pop %v746
    %v811 = vrcp.pop %v747
    %v812 = vrcp.pop %v748
    %v813 = vrcp.pop %v749
    %v814 = vrcp.pop %v750
    %v815 = vrcp.pop %v751
    %v816 = vrcp.pop %v752
    %v817 = vrcp.pop %v753
    %v818 = vrcp.pop %v754
    %v819 = vrcp.pop %v755
    %v820 = vrcp.pop %v756
    %v821 = vrcp.pop %v757
    %v822 = vrcp.pop %v758
    %v823 = vrcp.pop %v759
    %v824 = vrcp.pop %v760
    %v825 = vrcp.pop %v761
    %v826 = vrcp.pop %v762
    %v827 = vrcp.pop %v763
    %v828 = vrcp.pop %v764
    %v829 = vrcp.pop %v765
    %v830 = vrcp.pop %v766
    %v831 = vrcp.pop %v767
    %v832 = vrcp.pop %v768
    %v833 = vrcp.pop %v769
    %v834 = vrcp.pop %v770
    %v835 = vrcp.pop %v771
    %v836 = vrcp.pop %v772
    %v837 = vrcp.pop %v773
    %v838 = vrcp.pop %v774
    %v839 = vrcp.pop %v775
    %v840 = vrcp.pop %v776
    %v841 = vrcp.pop %v777
    %v842 = vrcp.pop %v778
    %v843 = vrcp.pop %v779
    %v844 = vrcp.pop %v780
    %v845 = vrcp.pop %v781
    %v846 = vrcp.pop %v782
    %847 = vst [vmem:[#allocation2] sm:$0xff] %v783
    %848 = vst [vmem:[#allocation2 + $0x8] sm:$0xff] %v784
    %849 = vst [vmem:[#allocation2 + $0x10] sm:$0xff] %v785
    %850 = vst [vmem:[#allocation2 + $0x18] sm:$0xff] %v786
    %851 = vst [vmem:[#allocation2 + $0x20] sm:$0xff] %v787
    %852 = vst [vmem:[#allocation2 + $0x28] sm:$0xff] %v788
    %853 = vst [vmem:[#allocation2 + $0x30] sm:$0xff] %v789
    %854 = vst [vmem:[#allocation2 + $0x38] sm:$0xff] %v790
    %855 = vst [vmem:[#allocation2 + $0x40] sm:$0xff] %v791
    %856 = vst [vmem:[#allocation2 + $0x48] sm:$0xff] %v792
    %857 = vst [vmem:[#allocation2 + $0x50] sm:$0xff] %v793
    %858 = vst [vmem:[#allocation2 + $0x58] sm:$0xff] %v794
    %859 = vst [vmem:[#allocation2 + $0x60] sm:$0xff] %v795
    %860 = vst [vmem:[#allocation2 + $0x68] sm:$0xff] %v796
    %861 = vst [vmem:[#allocation2 + $0x70] sm:$0xff] %v797
    %862 = vst [vmem:[#allocation2 + $0x78] sm:$0xff] %v798
    %863 = vst [vmem:[#allocation2 + $0x80] sm:$0xff] %v799
    %864 = vst [vmem:[#allocation2 + $0x88] sm:$0xff] %v800
    %865 = vst [vmem:[#allocation2 + $0x90] sm:$0xff] %v801
    %866 = vst [vmem:[#allocation2 + $0x98] sm:$0xff] %v802
    %867 = vst [vmem:[#allocation2 + $0xa0] sm:$0xff] %v803
    %868 = vst [vmem:[#allocation2 + $0xa8] sm:$0xff] %v804
    %869 = vst [vmem:[#allocation2 + $0xb0] sm:$0xff] %v805
    %870 = vst [vmem:[#allocation2 + $0xb8] sm:$0xff] %v806
    %871 = vst [vmem:[#allocation2 + $0xc0] sm:$0xff] %v807
    %872 = vst [vmem:[#allocation2 + $0xc8] sm:$0xff] %v808
    %873 = vst [vmem:[#allocation2 + $0xd0] sm:$0xff] %v809
    %874 = vst [vmem:[#allocation2 + $0xd8] sm:$0xff] %v810
    %875 = vst [vmem:[#allocation2 + $0xe0] sm:$0xff] %v811
    %876 = vst [vmem:[#allocation2 + $0xe8] sm:$0xff] %v812
    %877 = vst [vmem:[#allocation2 + $0xf0] sm:$0xff] %v813
    %878 = vst [vmem:[#allocation2 + $0xf8] sm:$0xff] %v814
    %879 = vst [vmem:[#allocation2 + $0x100] sm:$0xff] %v815
    %880 = vst [vmem:[#allocation2 + $0x108] sm:$0xff] %v816
    %881 = vst [vmem:[#allocation2 + $0x110] sm:$0xff] %v817
    %882 = vst [vmem:[#allocation2 + $0x118] sm:$0xff] %v818
    %883 = vst [vmem:[#allocation2 + $0x120] sm:$0xff] %v819
    %884 = vst [vmem:[#allocation2 + $0x128] sm:$0xff] %v820
    %885 = vst [vmem:[#allocation2 + $0x130] sm:$0xff] %v821
    %886 = vst [vmem:[#allocation2 + $0x138] sm:$0xff] %v822
    %887 = vst [vmem:[#allocation2 + $0x140] sm:$0xff] %v823
    %888 = vst [vmem:[#allocation2 + $0x148] sm:$0xff] %v824
    %889 = vst [vmem:[#allocation2 + $0x150] sm:$0xff] %v825
    %890 = vst [vmem:[#allocation2 + $0x158] sm:$0xff] %v826
    %891 = vst [vmem:[#allocation2 + $0x160] sm:$0xff] %v827
    %892 = vst [vmem:[#allocation2 + $0x168] sm:$0xff] %v828
    %893 = vst [vmem:[#allocation2 + $0x170] sm:$0xff] %v829
    %894 = vst [vmem:[#allocation2 + $0x178] sm:$0xff] %v830
    %895 = vst [vmem:[#allocation2 + $0x180] sm:$0xff] %v831
    %896 = vst [vmem:[#allocation2 + $0x188] sm:$0xff] %v832
    %897 = vst [vmem:[#allocation2 + $0x190] sm:$0xff] %v833
    %898 = vst [vmem:[#allocation2 + $0x198] sm:$0xff] %v834
    %899 = vst [vmem:[#allocation2 + $0x1a0] sm:$0xff] %v835
    %900 = vst [vmem:[#allocation2 + $0x1a8] sm:$0xff] %v836
    %901 = vst [vmem:[#allocation2 + $0x1b0] sm:$0xff] %v837
    %902 = vst [vmem:[#allocation2 + $0x1b8] sm:$0xff] %v838
    %903 = vst [vmem:[#allocation2 + $0x1c0] sm:$0xff] %v839
    %904 = vst [vmem:[#allocation2 + $0x1c8] sm:$0xff] %v840
    %905 = vst [vmem:[#allocation2 + $0x1d0] sm:$0xff] %v841
    %906 = vst [vmem:[#allocation2 + $0x1d8] sm:$0xff] %v842
    %907 = vst [vmem:[#allocation2 + $0x1e0] sm:$0xff] %v843
    %908 = vst [vmem:[#allocation2 + $0x1e8] sm:$0xff] %v844
    %909 = vst [vmem:[#allocation2 + $0x1f0] sm:$0xff] %v845
    %910 = vst [vmem:[#allocation2 + $0x1f8] sm:$0xff] %v846
    // Predicated region
    $region10: #{tpu_custom_call.1} parent=1 // pred_check
      _
    $region11: #{tpu_custom_call.1} parent=1 // pred_check_branch
      %912 = sbr.rel (0) target = $region13
    $region12: #{tpu_custom_call.1} parent=1 // pred_region
      %s914 = ssub.s32 8192, 8192
      %915 = vsyncadd [#allocation3], %s914
      %s916 = sshll.u32 [#allocation2], 4
      %s917 = int_to_ptr.vmem [resolvable:$true] %s916
      %922 = dma.vmem_to_hbm [thread:$0]  %s917, 8192, %s2, [#allocation3], 256, 256, 16
    $region13: #{tpu_custom_call.1} parent=1 // pred_fallthru
      _
    // Predicated region
    $region14: #{tpu_custom_call.1} parent=1 // pred_check
      _
    $region15: #{tpu_custom_call.1} parent=1 // pred_check_branch
      %924 = sbr.rel (0) target = $region17
    $region16: #{tpu_custom_call.1} parent=1 // pred_region
      %925 = dma.done [#allocation3], 8192
    $region17: #{tpu_custom_call.1} parent=1 // pred_fallthru
      _
    %926 = vsyncpa [#allocation3], 1

</llo_original>
